<compile_context>
chip_gen: v5e
topology: v5e:2x2
jax: 0.10.0
libtpu: 0.0.40
codegen_flags: <defaults>
</compile_context>

<pallas_src>
import functools

import jax
import jax.numpy as jnp
from jax.experimental import pallas as pl
from jax.experimental.pallas import tpu as pltpu


def _channel_gate_kernel(x_ref, w1t_ref, b1_ref, w2t_ref, b2_ref, o_ref, *, inv_hw):
    # x_ref / o_ref block: (Bt, C, HW) in the input dtype (HW = true H*W, full extent).
    # w1t: (C, Hid), b1: (1, Hid), w2t: (Hid, C), b2: (1, C) -- all f32, transposed
    # so the big C axis sits on lanes inside the tiny MLP matmuls.

    # ---- global pooling over the spatial (lane) axis, accumulated in f32 ----
    x = x_ref[...]
    avg = jnp.sum(x, axis=-1, dtype=jnp.float32) * inv_hw        # (Bt, C)
    mx = jnp.max(x, axis=-1).astype(jnp.float32)                 # (Bt, C)

    # ---- shared MLP (tiny; f32) ----
    w1t = w1t_ref[...]
    w2t = w2t_ref[...]
    b1 = b1_ref[...]
    b2 = b2_ref[...]
    h_a = jnp.maximum(jnp.dot(avg, w1t, preferred_element_type=jnp.float32) + b1, 0.0)
    h_m = jnp.maximum(jnp.dot(mx, w1t, preferred_element_type=jnp.float32) + b1, 0.0)
    # MLP(avg) + MLP(max) == (h_a + h_m) @ W2^T + 2*b2   (bias enters once per branch)
    att = jnp.dot(h_a + h_m, w2t, preferred_element_type=jnp.float32) + 2.0 * b2
    scale = jax.nn.sigmoid(att)                                   # (Bt, C) f32

    # ---- broadcast multiply; store in the source dtype (no f32 blow-up of the block) ----
    o_ref[...] = x_ref[...] * scale[:, :, None].astype(o_ref.dtype)


def channel_gate(x_nchw, w1, b1, w2, b2):
    """ChannelGate forward.

    x_nchw: (B, C, H, W) in any float dtype (f32 / bf16 ...; kept native in HBM).
    w1: (Hid, C), b1: (Hid,), w2: (C, Hid), b2: (C,)   (PyTorch nn.Linear layout).
    """
    B, C, H, W = x_nchw.shape
    HW = H * W
    hid = w1.shape[0]
    dtype = x_nchw.dtype
    itemsize = jnp.dtype(dtype).itemsize

    # No spatial padding: the block's last dim is the full HW extent (allowed by the
    # (8,128) rule because it equals the array dim), so the kernel streams exactly
    # 2 * B*C*HW*itemsize bytes and needs no masked-max machinery.
    x_flat = x_nchw.reshape(B, C, HW)

    # MLP params transposed so C is the lane axis inside the kernel.
    w1t = jnp.asarray(w1, jnp.float32).T          # (C, hid)
    w2t = jnp.asarray(w2, jnp.float32).T          # (hid, C)
    b1r = jnp.asarray(b1, jnp.float32).reshape(1, hid)
    b2r = jnp.asarray(b2, jnp.float32).reshape(1, C)

    # ---- choose the per-step batch tile Bt ----
    per_batch_bytes = C * HW * itemsize
    try:
        info = pltpu.get_tpu_info()
        vmem_cap = int(getattr(info, "vmem_capacity_bytes", 64 << 20))
    except Exception:  # unknown target / interpret mode
        vmem_cap = 64 << 20
    vmem_cap = min(max(vmem_cap, 32 << 20), 128 << 20)

    # ~8 MiB blocks: DMA per-step overhead (~0.35us) drops under ~5% of transfer time
    # even at v7x's ~3.2 TB/s.  The double-buffered in+out blocks (4x block) must fit
    # comfortably; the 8 MiB cap keeps 4x block = 32 MiB, safe on v7x's 64 MiB/core
    # even if get_tpu_info() reported a chip aggregate.
    per_block_budget = (vmem_cap // 2) // 4
    block_budget = min(per_block_budget, 8 << 20)

    Bt = int(max(1, min(B, block_budget // max(per_batch_bytes, 1))))
    # TODO(synk): if even Bt=1 overflows VMEM (very large C*H*W), add a streaming
    # fallback (memory_space=pl.ANY for x + pltpu.emit_pipeline over HW chunks).

    grid_b = pl.cdiv(B, Bt)
    # v7x: 2 TensorCores share the parallel grid axis — make sure both get work.
    if grid_b < 2 and B >= 2:
        Bt = pl.cdiv(B, 2)
        grid_b = pl.cdiv(B, Bt)

    block_bytes = Bt * per_batch_bytes
    weight_bytes = 4 * (C * hid + hid + hid * C + C)
    need = 4 * block_bytes + 2 * weight_bytes + (4 << 20)
    vmem_limit = int(min(max(need, 32 << 20), 100 << 20))

    kernel = functools.partial(_channel_gate_kernel, inv_hw=1.0 / HW)

    bytes_accessed = 2 * B * C * HW * itemsize + weight_bytes
    cost = pl.CostEstimate(
        flops=2 * B * C * HW + 4 * B * C * hid + 2 * B * C,
        transcendentals=B * C,
        bytes_accessed=bytes_accessed,
    )

    out_flat = pl.pallas_call(
        kernel,
        out_shape=jax.ShapeDtypeStruct((B, C, HW), dtype),
        grid_spec=pltpu.PrefetchScalarGridSpec(
            num_scalar_prefetch=0,
            grid=(grid_b,),
            in_specs=[
                pl.BlockSpec((Bt, C, HW), lambda b: (b, 0, 0)),    # x (per batch-tile)
                pl.BlockSpec((C, hid), lambda b: (0, 0)),          # W1^T (resident)
                pl.BlockSpec((1, hid), lambda b: (0, 0)),          # b1
                pl.BlockSpec((hid, C), lambda b: (0, 0)),          # W2^T
                pl.BlockSpec((1, C), lambda b: (0, 0)),            # b2
            ],
            out_specs=pl.BlockSpec((Bt, C, HW), lambda b: (b, 0, 0)),
        ),
        compiler_params=pltpu.CompilerParams(
            dimension_semantics=("parallel",),
            vmem_limit_bytes=vmem_limit,
        ),
        cost_estimate=cost,
    )(x_flat, w1t, b1r, w2t, b2r)

    return out_flat.reshape(B, C, H, W)


def channel_gate_ref(x, w1, b1, w2, b2):
    """Pure-JAX reference mirroring the PyTorch module (f32)."""
    avg = jnp.mean(x, axis=(2, 3))          # (B, C)
    mx = jnp.max(x, axis=(2, 3))            # (B, C)

    def mlp(v):
        h = jnp.maximum(v @ w1.T + b1, 0.0)
        return h @ w2.T + b2

    att = mlp(avg) + mlp(mx)                # (B, C)
    scale = jax.nn.sigmoid(att)[:, :, None, None]
    return x * scale


if __name__ == "__main__":
    # Shapes consistent with the module: gate_channels=32, reduction_ratio=4.
    B, C, H, W = 2, 32, 16, 16
    reduction_ratio = 4
    hid = C // reduction_ratio

    key = jax.random.PRNGKey(0)
    kx, k1, k2, k3, k4 = jax.random.split(key, 5)

    x = jax.random.normal(kx, (B, C, H, W), dtype=jnp.float32)
    # PyTorch nn.Linear layout: W1 (hid, C), W2 (C, hid).
    w1 = jax.random.normal(k1, (hid, C), dtype=jnp.float32) * 0.1
    b1 = jax.random.normal(k2, (hid,), dtype=jnp.float32) * 0.1
    w2 = jax.random.normal(k3, (C, hid), dtype=jnp.float32) * 0.1
    b2 = jax.random.normal(k4, (C,), dtype=jnp.float32) * 0.1

    # 1) f32, 128-multiple spatial (HW = 256).
    out = jax.block_until_ready(channel_gate(x, w1, b1, w2, b2))
    ref = channel_gate_ref(x, w1, b1, w2, b2)
    assert out.shape == (B, C, H, W)
    assert jnp.allclose(out, ref, atol=1e-5, rtol=1e-5), "f32 mismatch vs reference"

    # 2) f32, non-128-multiple spatial (7x7) -> full-extent last block dim, no padding.
    x_odd = jax.random.normal(kx, (B, C, 7, 7), dtype=jnp.float32)
    out_odd = jax.block_until_ready(channel_gate(x_odd, w1, b1, w2, b2))
    ref_odd = channel_gate_ref(x_odd, w1, b1, w2, b2)
    assert jnp.allclose(out_odd, ref_odd, atol=1e-5, rtol=1e-5), "odd-HW mismatch"

    # 3) batch not a multiple of the tile (B=3 -> cdiv grid, partial trailing block).
    x3 = jax.random.normal(k1, (3, C, 7, 7), dtype=jnp.float32)
    out3 = jax.block_until_ready(channel_gate(x3, w1, b1, w2, b2))
    ref3 = channel_gate_ref(x3, w1, b1, w2, b2)
    assert jnp.allclose(out3, ref3, atol=1e-5, rtol=1e-5), "partial-block mismatch"

    # 4) bf16 native-dtype path (HBM traffic stays bf16; compute in f32 inside;
    #    scale is cast back to bf16 before the multiply -> slightly more rounding
    #    than the f32 reference, covered by the tolerance below).
    x_bf = x.astype(jnp.bfloat16)
    out_bf = jax.block_until_ready(channel_gate(x_bf, w1, b1, w2, b2))
    ref_bf = channel_gate_ref(x_bf.astype(jnp.float32), w1, b1, w2, b2)
    assert out_bf.dtype == jnp.bfloat16
    assert float(jnp.max(jnp.abs(out_bf.astype(jnp.float32) - ref_bf))) < 5e-2, "bf16 mismatch"

    print("KERNEL_OK")
</pallas_src>

<mosaic_0001>
module attributes {stable_mosaic.version = 11 : i64} {
  func.func @_channel_gate_kernel(%arg0: i32, %arg1: memref<1x32x256xf32, #tpu.memory_space<vmem>>, %arg2: memref<32x8xf32, #tpu.memory_space<vmem>>, %arg3: memref<1x8xf32, #tpu.memory_space<vmem>>, %arg4: memref<8x32xf32, #tpu.memory_space<vmem>>, %arg5: memref<1x32xf32, #tpu.memory_space<vmem>>, %arg6: memref<1x32x256xf32, #tpu.memory_space<vmem>>) attributes {dimension_semantics = [#tpu.dimension_semantics<parallel>], iteration_bounds = array<i64: 2>, scalar_prefetch = 0 : i64, scratch_operands = 0 : i64, tpu.core_type = #tpu.core_type<tc>, window_params = [{transform_indices = @transform_0, window_bounds = array<i64: 1, 32, 256>}, {pipeline_mode = #tpu.pipeline_mode<synchronous>, transform_indices = @transform_1, window_bounds = array<i64: 32, 8>}, {pipeline_mode = #tpu.pipeline_mode<synchronous>, transform_indices = @transform_2, window_bounds = array<i64: 1, 8>}, {pipeline_mode = #tpu.pipeline_mode<synchronous>, transform_indices = @transform_3, window_bounds = array<i64: 8, 32>}, {pipeline_mode = #tpu.pipeline_mode<synchronous>, transform_indices = @transform_4, window_bounds = array<i64: 1, 32>}, {transform_indices = @transform_5, window_bounds = array<i64: 1, 32, 256>}]} {
    %c0 = arith.constant 0 : index
    %c0_0 = arith.constant 0 : index
    %c0_1 = arith.constant 0 : index
    %0 = vector.load %arg1[%c0, %c0_0, %c0_1] : memref<1x32x256xf32, #tpu.memory_space<vmem>>, vector<1x32x256xf32>
    %cst = arith.constant dense<0.000000e+00> : vector<1x32xf32>
    %1 = vector.multi_reduction <add>, %0, %cst [2] : vector<1x32x256xf32> to vector<1x32xf32>
    %cst_2 = arith.constant 3.906250e-03 : f32
    %2 = vector.broadcast %cst_2 : f32 to vector<1x32xf32>
    %3 = arith.mulf %1, %2 : vector<1x32xf32>
    %cst_3 = arith.constant dense<0xFF800000> : vector<1x32xf32>
    %4 = vector.multi_reduction <maximumf>, %0, %cst_3 [2] : vector<1x32x256xf32> to vector<1x32xf32>
    %c0_4 = arith.constant 0 : index
    %c0_5 = arith.constant 0 : index
    %5 = vector.load %arg2[%c0_4, %c0_5] : memref<32x8xf32, #tpu.memory_space<vmem>>, vector<32x8xf32>
    %c0_6 = arith.constant 0 : index
    %c0_7 = arith.constant 0 : index
    %6 = vector.load %arg4[%c0_6, %c0_7] : memref<8x32xf32, #tpu.memory_space<vmem>>, vector<8x32xf32>
    %c0_8 = arith.constant 0 : index
    %c0_9 = arith.constant 0 : index
    %7 = vector.load %arg3[%c0_8, %c0_9] : memref<1x8xf32, #tpu.memory_space<vmem>>, vector<1x8xf32>
    %c0_10 = arith.constant 0 : index
    %c0_11 = arith.constant 0 : index
    %8 = vector.load %arg5[%c0_10, %c0_11] : memref<1x32xf32, #tpu.memory_space<vmem>>, vector<1x32xf32>
    %cst_12 = arith.constant dense<0.000000e+00> : vector<1x8xf32>
    %9 = tpu.matmul %3, %5, %cst_12 {dimension_numbers = #tpu.dot_dimension_numbers<[1], [0], [0], [1], [0, 0, 1, 1], [], []>} : vector<1x32xf32>, vector<32x8xf32>, vector<1x8xf32> -> vector<1x8xf32>
    %10 = arith.addf %9, %7 : vector<1x8xf32>
    %cst_13 = arith.constant 0.000000e+00 : f32
    %11 = vector.broadcast %cst_13 : f32 to vector<1x8xf32>
    %12 = arith.maximumf %10, %11 : vector<1x8xf32>
    %cst_14 = arith.constant dense<0.000000e+00> : vector<1x8xf32>
    %13 = tpu.matmul %4, %5, %cst_14 {dimension_numbers = #tpu.dot_dimension_numbers<[1], [0], [0], [1], [0, 0, 1, 1], [], []>} : vector<1x32xf32>, vector<32x8xf32>, vector<1x8xf32> -> vector<1x8xf32>
    %14 = arith.addf %13, %7 : vector<1x8xf32>
    %cst_15 = arith.constant 0.000000e+00 : f32
    %15 = vector.broadcast %cst_15 : f32 to vector<1x8xf32>
    %16 = arith.maximumf %14, %15 : vector<1x8xf32>
    %17 = arith.addf %12, %16 : vector<1x8xf32>
    %cst_16 = arith.constant dense<0.000000e+00> : vector<1x32xf32>
    %18 = tpu.matmul %17, %6, %cst_16 {dimension_numbers = #tpu.dot_dimension_numbers<[1], [0], [0], [1], [0, 0, 1, 1], [], []>} : vector<1x8xf32>, vector<8x32xf32>, vector<1x32xf32> -> vector<1x32xf32>
    %cst_17 = arith.constant 2.000000e+00 : f32
    %19 = vector.broadcast %cst_17 : f32 to vector<1x32xf32>
    %20 = arith.mulf %19, %8 : vector<1x32xf32>
    %21 = arith.addf %18, %20 : vector<1x32xf32>
    %22 = arith.negf %21 : vector<1x32xf32>
    %23 = math.exp %22 : vector<1x32xf32>
    %cst_18 = arith.constant 1.000000e+00 : f32
    %24 = vector.broadcast %cst_18 : f32 to vector<1x32xf32>
    %25 = arith.addf %24, %23 : vector<1x32xf32>
    %26 = arith.divf %24, %25 : vector<1x32xf32>
    %c0_19 = arith.constant 0 : index
    %c0_20 = arith.constant 0 : index
    %c0_21 = arith.constant 0 : index
    %27 = vector.load %arg1[%c0_19, %c0_20, %c0_21] : memref<1x32x256xf32, #tpu.memory_space<vmem>>, vector<1x32x256xf32>
    %28 = vector.shape_cast %26 : vector<1x32xf32> to vector<1x32x1xf32>
    %29 = vector.broadcast %28 : vector<1x32x1xf32> to vector<1x32x256xf32>
    %30 = arith.mulf %27, %29 : vector<1x32x256xf32>
    %c0_22 = arith.constant 0 : index
    %c0_23 = arith.constant 0 : index
    %c0_24 = arith.constant 0 : index
    %31 = vector.load %arg6[%c0_22, %c0_23, %c0_24] : memref<1x32x256xf32, #tpu.memory_space<vmem>>, vector<1x32x256xf32>
    tpu.vector_store %arg6[%c0_22, %c0_23, %c0_24], %30 {strides = array<i32>} : memref<1x32x256xf32, #tpu.memory_space<vmem>>, vector<1x32x256xf32>,
    return
  }
  func.func @transform_0(%arg0: i32) -> (i32, i32, i32) {
    %c0_i32 = arith.constant 0 : i32
    %c0_i32_0 = arith.constant 0 : i32
    %c0_i32_1 = arith.constant 0 : i32
    return %arg0, %c0_i32, %c0_i32_0 : i32, i32, i32
  }
  func.func @transform_1(%arg0: i32) -> (i32, i32) {
    %c0_i32 = arith.constant 0 : i32
    %c0_i32_0 = arith.constant 0 : i32
    %c0_i32_1 = arith.constant 0 : i32
    return %c0_i32, %c0_i32_0 : i32, i32
  }
  func.func @transform_2(%arg0: i32) -> (i32, i32) {
    %c0_i32 = arith.constant 0 : i32
    %c0_i32_0 = arith.constant 0 : i32
    %c0_i32_1 = arith.constant 0 : i32
    return %c0_i32, %c0_i32_0 : i32, i32
  }
  func.func @transform_3(%arg0: i32) -> (i32, i32) {
    %c0_i32 = arith.constant 0 : i32
    %c0_i32_0 = arith.constant 0 : i32
    %c0_i32_1 = arith.constant 0 : i32
    return %c0_i32, %c0_i32_0 : i32, i32
  }
  func.func @transform_4(%arg0: i32) -> (i32, i32) {
    %c0_i32 = arith.constant 0 : i32
    %c0_i32_0 = arith.constant 0 : i32
    %c0_i32_1 = arith.constant 0 : i32
    return %c0_i32, %c0_i32_0 : i32, i32
  }
  func.func @transform_5(%arg0: i32) -> (i32, i32, i32) {
    %c0_i32 = arith.constant 0 : i32
    %c0_i32_0 = arith.constant 0 : i32
    %c0_i32_1 = arith.constant 0 : i32
    return %arg0, %c0_i32, %c0_i32_0 : i32, i32, i32
  }
}

</mosaic_0001>

<llo_original>
// kernel: tpu_custom_call.1
$region0: #{tpu_custom_call.1}
  #allocation0 [shape = 'u32[]', space=smem, size = 0x4, offset = 0x4, fixed_abs, tag = 'smem constant byte address 0x4 - core index']
  #allocation1 [shape = 'u32[72,128]{1,0:T(1,128)}', space=vmem, size = 0x9000, scoped, tag = 'internal scratch']
  %s0 = inlined_call_operand.hbm [shape: f32[2,32,256], index: 0, kind: input, shape index: {}]
  %s1 = inlined_call_operand.vmem [shape: f32[32,8], index: 1, kind: input, shape index: {}]
  %s2 = inlined_call_operand.vmem [shape: f32[1,8], index: 2, kind: input, shape index: {}]
  %s3 = inlined_call_operand.vmem [shape: f32[8,32], index: 3, kind: input, shape index: {}]
  %s4 = inlined_call_operand.vmem [shape: f32[1,32], index: 4, kind: input, shape index: {}]
  %s5 = inlined_call_operand.hbm [shape: f32[2,32,256], index: 5, kind: output, shape index: {}]
  %s6 = sld [smem:[#allocation0]]
  $region57: #{tpu_custom_call.1} parent=0
    _
  %s8 = ssub.s32 1, %s6
  %s9 = scalar_select 0, %s8, %s6
  $region1: #{tpu_custom_call.1} parent=0
    #allocation2 [shape = 'u8[65536]{0}', space=vmem, size = 0x10000, scoped, tag = 'input window, operand 0']
    #allocation3 [shape = 's32[2]{0}', space=sflag, size = 0x8, scoped, tag = 'scoped memory for tpu_custom_call.1']
    #allocation4 [shape = 's32[2]{0}', space=sflag, size = 0x8, scoped, tag = 'scoped memory for tpu_custom_call.1']
    #allocation5 [shape = 'u8[65536]{0}', space=vmem, size = 0x10000, scoped, tag = 'output window, operand 0']
    %10 = vsyncpa [#allocation3], 0
    %s11 = scalar_lea.sflag [#allocation3], 1
    %12 = vsyncpa %s11, 0
    %13 = vsyncpa [#allocation4], 0
    %s14 = scalar_lea.sflag [#allocation4], 1
    %15 = vsyncpa %s14, 0
    loop: start=0, step=1, limit=4
    $region2: #{tpu_custom_call.1} parent=1 // loop_pre_header
      _
    $region3: #{tpu_custom_call.1} parent=1 // loop_header
      %s17 = sphi 0, %s21
      %p18 = scmp.ge.s32.totalorder %s17, 4
      %s27 = sphi 0, %s29
      %s30 = sphi 0, %s27
      %s31 = sphi 0, %s30
      %s47 = sphi 0, %s31
      %s51 = sphi 0, %s51
      %s53 = sphi 0, %s51
      %s54 = sphi 0, %s53
      %s68 = sphi 0, %s54
      %s72 = sphi 0, %s72
      %s74 = sphi 0, %s72
      %s75 = sphi 0, %s74
      %s89 = sphi 0, %s75
      %s93 = sphi 0, %s93
      %s95 = sphi 0, %s93
      %s96 = sphi 0, %s95
      %s110 = sphi 0, %s96
      %s114 = sphi 0, %s114
      %s116 = sphi 0, %s114
      %s117 = sphi 0, %s116
      %s131 = sphi 0, %s117
      %s137 = sphi 0, %s139
      %s140 = sphi 0, %s137
      %s141 = sphi 0, %s140
      %s157 = sphi 0, %s141
    $region4: #{tpu_custom_call.1} parent=1 // loop_header_branch
      %20 = sbr.rel (%p18) target = $region8
    $region5: #{tpu_custom_call.1} parent=1 // loop_body
      %s22 = ssub.s32 %s17, 1
      %s23 = ssub.s32 %s17, 2
      %s24 = sadd.s32 %s17, 1
      %s25 = ssub.s32 %s17, %s24
      %p26 = scmp.eq.s32.totalorder %s25, 0
      %s28 = sadd.s32 %s27, 1
      %s29 = scalar_select %p26, %s27, %s28
      %p32 = pneg %p26
      %p33 = scmp.eq.s32.totalorder %s17, 1
      %p34 = por %p32, %p33
      %p35 = scmp.ne.s32.totalorder %s27, %s30
      %p36 = scmp.eq.s32.totalorder %s17, 0
      %p37 = por %p35, %p36
      %p38 = scmp.ne.s32.totalorder %s27, %s30
      %p39 = scmp.eq.s32.totalorder %s22, 1
      %p40 = por %p38, %p39
      %p41 = scmp.ne.s32.totalorder %s30, %s31
      %p42 = scmp.eq.s32.totalorder %s22, 0
      %p43 = por %p41, %p42
      %p44 = scmp.ne.s32.totalorder %s30, %s31
      %p45 = scmp.eq.s32.totalorder %s23, 1
      %p46 = por %p44, %p45
      %p48 = scmp.ne.s32.totalorder %s31, %s47
      %p49 = scmp.eq.s32.totalorder %s23, 0
      %p50 = por %p48, %p49
      %s52 = sadd.s32 %s51, 1
      %p55 = scmp.eq.s32.totalorder %s17, 1
      %p56 = scmp.ne.s32.totalorder %s51, %s53
      %p57 = scmp.eq.s32.totalorder %s17, 0
      %p58 = por %p56, %p57
      %p59 = scmp.ne.s32.totalorder %s51, %s53
      %p60 = scmp.eq.s32.totalorder %s22, 1
      %p61 = por %p59, %p60
      %p62 = scmp.ne.s32.totalorder %s53, %s54
      %p63 = scmp.eq.s32.totalorder %s22, 0
      %p64 = por %p62, %p63
      %p65 = scmp.ne.s32.totalorder %s53, %s54
      %p66 = scmp.eq.s32.totalorder %s23, 1
      %p67 = por %p65, %p66
      %p69 = scmp.ne.s32.totalorder %s54, %s68
      %p70 = scmp.eq.s32.totalorder %s23, 0
      %p71 = por %p69, %p70
      %s73 = sadd.s32 %s72, 1
      %p76 = scmp.eq.s32.totalorder %s17, 1
      %p77 = scmp.ne.s32.totalorder %s72, %s74
      %p78 = scmp.eq.s32.totalorder %s17, 0
      %p79 = por %p77, %p78
      %p80 = scmp.ne.s32.totalorder %s72, %s74
      %p81 = scmp.eq.s32.totalorder %s22, 1
      %p82 = por %p80, %p81
      %p83 = scmp.ne.s32.totalorder %s74, %s75
      %p84 = scmp.eq.s32.totalorder %s22, 0
      %p85 = por %p83, %p84
      %p86 = scmp.ne.s32.totalorder %s74, %s75
      %p87 = scmp.eq.s32.totalorder %s23, 1
      %p88 = por %p86, %p87
      %p90 = scmp.ne.s32.totalorder %s75, %s89
      %p91 = scmp.eq.s32.totalorder %s23, 0
      %p92 = por %p90, %p91
      %s94 = sadd.s32 %s93, 1
      %p97 = scmp.eq.s32.totalorder %s17, 1
      %p98 = scmp.ne.s32.totalorder %s93, %s95
      %p99 = scmp.eq.s32.totalorder %s17, 0
      %p100 = por %p98, %p99
      %p101 = scmp.ne.s32.totalorder %s93, %s95
      %p102 = scmp.eq.s32.totalorder %s22, 1
      %p103 = por %p101, %p102
      %p104 = scmp.ne.s32.totalorder %s95, %s96
      %p105 = scmp.eq.s32.totalorder %s22, 0
      %p106 = por %p104, %p105
      %p107 = scmp.ne.s32.totalorder %s95, %s96
      %p108 = scmp.eq.s32.totalorder %s23, 1
      %p109 = por %p107, %p108
      %p111 = scmp.ne.s32.totalorder %s96, %s110
      %p112 = scmp.eq.s32.totalorder %s23, 0
      %p113 = por %p111, %p112
      %s115 = sadd.s32 %s114, 1
      %p118 = scmp.eq.s32.totalorder %s17, 1
      %p119 = scmp.ne.s32.totalorder %s114, %s116
      %p120 = scmp.eq.s32.totalorder %s17, 0
      %p121 = por %p119, %p120
      %p122 = scmp.ne.s32.totalorder %s114, %s116
      %p123 = scmp.eq.s32.totalorder %s22, 1
      %p124 = por %p122, %p123
      %p125 = scmp.ne.s32.totalorder %s116, %s117
      %p126 = scmp.eq.s32.totalorder %s22, 0
      %p127 = por %p125, %p126
      %p128 = scmp.ne.s32.totalorder %s116, %s117
      %p129 = scmp.eq.s32.totalorder %s23, 1
      %p130 = por %p128, %p129
      %p132 = scmp.ne.s32.totalorder %s117, %s131
      %p133 = scmp.eq.s32.totalorder %s23, 0
      %p134 = por %p132, %p133
      %s135 = ssub.s32 %s17, %s24
      %p136 = scmp.eq.s32.totalorder %s135, 0
      %s138 = sadd.s32 %s137, 1
      %s139 = scalar_select %p136, %s137, %s138
      %p142 = pneg %p136
      %p143 = scmp.eq.s32.totalorder %s17, 1
      %p144 = por %p142, %p143
      %p145 = scmp.ne.s32.totalorder %s137, %s140
      %p146 = scmp.eq.s32.totalorder %s17, 0
      %p147 = por %p145, %p146
      %p148 = scmp.ne.s32.totalorder %s137, %s140
      %p149 = scmp.eq.s32.totalorder %s22, 1
      %p150 = por %p148, %p149
      %p151 = scmp.ne.s32.totalorder %s140, %s141
      %p152 = scmp.eq.s32.totalorder %s22, 0
      %p153 = por %p151, %p152
      %p154 = scmp.ne.s32.totalorder %s140, %s141
      %p155 = scmp.eq.s32.totalorder %s23, 1
      %p156 = por %p154, %p155
      %p158 = scmp.ne.s32.totalorder %s141, %s157
      %p159 = scmp.eq.s32.totalorder %s23, 0
      %p160 = por %p158, %p159
      %p161 = scmp.le.s32.totalorder 1, %s17
      %p162 = scmp.lt.s32.totalorder %s17, 3
      %p163 = pnand %p161, %p162
      %p164 = pneg %p163
      // Predicated region
      $region9: #{tpu_custom_call.1} parent=5 // pred_check
        _
      $region10: #{tpu_custom_call.1} parent=5 // pred_check_branch
        %166 = sbr.rel (%p163) target = $region12
      $region11: #{tpu_custom_call.1} parent=5 // pred_region
        %s167 = ssub.s32 %s17, 1
        // Predicated region
        $region13: #{tpu_custom_call.1} parent=11 // pred_check
          %p168 = pneg %p64
        $region14: #{tpu_custom_call.1} parent=11 // pred_check_branch
          %170 = sbr.rel (%p168) target = $region16
        $region15: #{tpu_custom_call.1} parent=11 // pred_region
          _
        $region16: #{tpu_custom_call.1} parent=11 // pred_fallthru
          _
        // Predicated region
        $region17: #{tpu_custom_call.1} parent=11 // pred_check
          %p171 = pneg %p85
        $region18: #{tpu_custom_call.1} parent=11 // pred_check_branch
          %173 = sbr.rel (%p171) target = $region20
        $region19: #{tpu_custom_call.1} parent=11 // pred_region
          _
        $region20: #{tpu_custom_call.1} parent=11 // pred_fallthru
          _
        // Predicated region
        $region21: #{tpu_custom_call.1} parent=11 // pred_check
          %p174 = pneg %p106
        $region22: #{tpu_custom_call.1} parent=11 // pred_check_branch
          %176 = sbr.rel (%p174) target = $region24
        $region23: #{tpu_custom_call.1} parent=11 // pred_region
          _
        $region24: #{tpu_custom_call.1} parent=11 // pred_fallthru
          _
        // Predicated region
        $region25: #{tpu_custom_call.1} parent=11 // pred_check
          %p177 = pneg %p127
        $region26: #{tpu_custom_call.1} parent=11 // pred_check_branch
          %179 = sbr.rel (%p177) target = $region28
        $region27: #{tpu_custom_call.1} parent=11 // pred_region
          _
        $region28: #{tpu_custom_call.1} parent=11 // pred_fallthru
          _
      $region12: #{tpu_custom_call.1} parent=5 // pred_fallthru
        _
      %p180 = scmp.lt.s32.totalorder %s17, 2
      // Predicated region
      $region29: #{tpu_custom_call.1} parent=5 // pred_check
        %p181 = pneg %p180
      $region30: #{tpu_custom_call.1} parent=5 // pred_check_branch
        %183 = sbr.rel (%p181) target = $region32
      $region31: #{tpu_custom_call.1} parent=5 // pred_region
        // Predicated region
        $region33: #{tpu_custom_call.1} parent=31 // pred_check
          %p184 = pneg %p37
        $region34: #{tpu_custom_call.1} parent=31 // pred_check_branch
          %186 = sbr.rel (%p184) target = $region36
        $region35: #{tpu_custom_call.1} parent=31 // pred_region
          %s187 = sand.u32 %s27, 1
          %s188 = scalar_lea.sflag [#allocation3], %s187
          %s189 = sand.u32 %s27, 1
          %s190 = smul.addr %s189, 64
          %s191 = scalar_lea.vmem [#allocation2], %s190
          %193 = vsyncadd %s188, 0
          %s194 = smul.addr %s17, 8
          %s195 = smul.addr %s194, 8
          %s196 = scalar_lea.hbm %s0, %s195
          %s197 = sshll.u32 %s196, 4
          %s198 = int_to_ptr.hbm [resolvable:$true] %s197
          %s199 = sshll.u32 %s191, 4
          %s200 = int_to_ptr.vmem [resolvable:$true] %s199
          %205 = dma.hbm_to_vmem [thread:$0]  %s198, 1024, %s200, %s188, 256, 256, 16
        $region36: #{tpu_custom_call.1} parent=31 // pred_fallthru
          _
      $region32: #{tpu_custom_call.1} parent=5 // pred_fallthru
        _
      %p206 = scmp.le.s32.totalorder 1, %s17
      %p207 = scmp.lt.s32.totalorder %s17, 3
      %p208 = pnand %p206, %p207
      %p209 = pneg %p208
      // Predicated region
      $region37: #{tpu_custom_call.1} parent=5 // pred_check
        _
      $region38: #{tpu_custom_call.1} parent=5 // pred_check_branch
        %211 = sbr.rel (%p208) target = $region40
      $region39: #{tpu_custom_call.1} parent=5 // pred_region
        %s212 = ssub.s32 %s17, 1
        %s213 = sand.u32 %s30, 1
        %s214 = scalar_lea.sflag [#allocation3], %s213
        %s215 = sand.u32 %s30, 1
        %s216 = smul.addr %s215, 64
        %s217 = scalar_lea.vmem [#allocation2], %s216
        // Predicated region
        $region41: #{tpu_custom_call.1} parent=39 // pred_check
          %p218 = pneg %p43
        $region42: #{tpu_custom_call.1} parent=39 // pred_check_branch
          %220 = sbr.rel (%p218) target = $region44
        $region43: #{tpu_custom_call.1} parent=39 // pred_region
          %222 = dma.done %s214, 1024
        $region44: #{tpu_custom_call.1} parent=39 // pred_fallthru
          _
        %s223 = sand.u32 %s30, 1
        %s224 = scalar_lea.sflag [#allocation3], %s223
        %s225 = sand.u32 %s30, 1
        %s226 = smul.addr %s225, 64
        %s227 = scalar_lea.vmem [#allocation2], %s226
        %p228 = pneg %p43
        %p229 = pneg %p40
        %p230 = pneg %p64
        %p231 = pneg %p61
        %p232 = pneg %p85
        %p233 = pneg %p82
        %p234 = pneg %p106
        %p235 = pneg %p103
        %p236 = pneg %p127
        %p237 = pneg %p124
        %p238 = pneg %p153
        %p239 = pneg %p150
        %s240 = sand.u32 %s140, 1
        %s241 = scalar_lea.sflag [#allocation4], %s240
        %s242 = sand.u32 %s140, 1
        %s243 = smul.addr %s242, 64
        %s244 = scalar_lea.vmem [#allocation5], %s243
        %v245 = vld [vmem:[%s217] sm:$0xff]
        %v246 = vld [vmem:[%s217 + $0x8] sm:$0xff]
        %v247 = vld [vmem:[%s217 + $0x10] sm:$0xff]
        %v248 = vld [vmem:[%s217 + $0x18] sm:$0xff]
        %v249 = vld [vmem:[%s217 + $0x20] sm:$0xff]
        %v250 = vld [vmem:[%s217 + $0x28] sm:$0xff]
        %v251 = vld [vmem:[%s217 + $0x30] sm:$0xff]
        %v252 = vld [vmem:[%s217 + $0x38] sm:$0xff]
        %v253 = vadd.f32 %v245, %v246
        %254 = vadd.xlane.f32.xlu0 %v253
        %v255 = vpop.xlane.xlu0 %254
        %v256 = vadd.f32 %v247, %v248
        %257 = vadd.xlane.f32.xlu0 %v256
        %v258 = vpop.xlane.xlu0 %257
        %v259 = vadd.f32 %v249, %v250
        %260 = vadd.xlane.f32.xlu0 %v259
        %v261 = vpop.xlane.xlu0 %260
        %v262 = vadd.f32 %v251, %v252
        %263 = vadd.xlane.f32.xlu0 %v262
        %v264 = vpop.xlane.xlu0 %263
        %v265 = vmul.f32 %v255, 0.00390625
        %v266 = vmul.f32 %v258, 0.00390625
        %v267 = vmul.f32 %v261, 0.00390625
        %v268 = vmul.f32 %v264, 0.00390625
        %v269 = vmax.f32 %v245, %v246
        %270 = vmax.xlane.f32.xlu0 %v269
        %v271 = vpop.xlane.xlu0 %270
        %v272 = vmax.f32 %v247, %v248
        %273 = vmax.xlane.f32.xlu0 %v272
        %v274 = vpop.xlane.xlu0 %273
        %v275 = vmax.f32 %v249, %v250
        %276 = vmax.xlane.f32.xlu0 %v275
        %v277 = vpop.xlane.xlu0 %276
        %v278 = vmax.f32 %v251, %v252
        %279 = vmax.xlane.f32.xlu0 %v278
        %v280 = vpop.xlane.xlu0 %279
        %v281 = vld [vmem:[%s1] sm:$0xff]
        %v282 = vld [vmem:[%s1 + $0x8] sm:$0xff]
        %v283 = vld [vmem:[%s1 + $0x10] sm:$0xff]
        %v284 = vld [vmem:[%s1 + $0x18] sm:$0xff]
        %v285 = vld [vmem:[%s3] sm:$0xff]
        %v286 = vld [vmem:[%s2] sm:$0x1]
        %v287 = vld [vmem:[%s4] sm:$0x1]
        %v292 = vlaneseq
        %v293 = vand.u32 %v292, 127
        %v294 = vperm.slane %v265, %v293
        %v295 = vadd.s32 %v293, 4294967288
        %v296 = vperm.slane %v266, %v295
        %vm297 = vcmask 130112
        %v298 = vsel %vm297, %v296, %v294
        %v299 = vadd.s32 %v293, 4294967280
        %v300 = vperm.slane %v267, %v299
        %vm301 = vcmask 195712
        %v302 = vsel %vm301, %v300, %v298
        %v303 = vadd.s32 %v293, 4294967272
        %v304 = vperm.slane %v268, %v303
        %vm305 = vcmask 261312
        %v306 = vsel %vm305, %v304, %v302
        %vm307 = vcmask 261120
        %v308 = vsel %vm307, %v306, 0
        %310 = vmatpush.msra.mxu0 0.0
        %311 = vmatpush.msra.mxu0 0.0
        %312 = vmatpush.msra.mxu0 0.0
        %313 = vmatpush.msra.mxu0 0.0
        %314 = vmatpush.msra.mxu0 0.0
        %315 = vmatpush.msra.mxu0 0.0
        %316 = vmatpush.msra.mxu0 0.0
        %317 = vmatpush.msra.mxu0 0.0
        %318 = vmatpush.msra.mxu0 0.0
        %319 = vmatpush.msra.mxu0 0.0
        %320 = vmatpush.msra.mxu0 0.0
        %321 = vmatpush.msra.mxu0 0.0
        %322 = vmatpush.msra.mxu0 %v284
        %323 = vmatpush.msra.mxu0 %v283
        %324 = vmatpush.msra.mxu0 %v282
        %325 = vmatpush.msra.mxu0 %v281
        %326 = vmatmul.f32.gmra.mxu0 %v308
        %v327 = vpop.f32.mrf.mxu0
        %v328 = vadd.f32 %v286, %v327
        %329 = vdwg.mxu0
        %v330 = vmax.f32 %v328, 0.0
        %v335 = vperm.slane %v271, %v293
        %v336 = vperm.slane %v274, %v295
        %v337 = vsel %vm297, %v336, %v335
        %v338 = vperm.slane %v277, %v299
        %v339 = vsel %vm301, %v338, %v337
        %v340 = vperm.slane %v280, %v303
        %v341 = vsel %vm305, %v340, %v339
        %v342 = vsel %vm307, %v341, 0
        %344 = vmatpush.msra.mxu0 0.0
        %345 = vmatpush.msra.mxu0 0.0
        %346 = vmatpush.msra.mxu0 0.0
        %347 = vmatpush.msra.mxu0 0.0
        %348 = vmatpush.msra.mxu0 0.0
        %349 = vmatpush.msra.mxu0 0.0
        %350 = vmatpush.msra.mxu0 0.0
        %351 = vmatpush.msra.mxu0 0.0
        %352 = vmatpush.msra.mxu0 0.0
        %353 = vmatpush.msra.mxu0 0.0
        %354 = vmatpush.msra.mxu0 0.0
        %355 = vmatpush.msra.mxu0 0.0
        %356 = vmatpush.msra.mxu0 %v284
        %357 = vmatpush.msra.mxu0 %v283
        %358 = vmatpush.msra.mxu0 %v282
        %359 = vmatpush.msra.mxu0 %v281
        %360 = vmatmul.f32.gmra.mxu0 %v342
        %v361 = vpop.f32.mrf.mxu0
        %v362 = vadd.f32 %v286, %v361
        %363 = vdwg.mxu0
        %v364 = vmax.f32 %v362, 0.0
        %v365 = vadd.f32 %v330, %v364
        %v366 = vmul.f32 %v287, 2.0
        %vm367 = vcmask 64512
        %v369 = vsel %vm367, %v365, 0
        %371 = vmatpush.msra.mxu0 0.0
        %372 = vmatpush.msra.mxu0 0.0
        %373 = vmatpush.msra.mxu0 0.0
        %374 = vmatpush.msra.mxu0 0.0
        %375 = vmatpush.msra.mxu0 0.0
        %376 = vmatpush.msra.mxu0 0.0
        %377 = vmatpush.msra.mxu0 0.0
        %378 = vmatpush.msra.mxu0 0.0
        %379 = vmatpush.msra.mxu0 0.0
        %380 = vmatpush.msra.mxu0 0.0
        %381 = vmatpush.msra.mxu0 0.0
        %382 = vmatpush.msra.mxu0 0.0
        %383 = vmatpush.msra.mxu0 0.0
        %384 = vmatpush.msra.mxu0 0.0
        %385 = vmatpush.msra.mxu0 0.0
        %386 = vmatpush.msra.mxu0 %v285
        %387 = vmatmul.f32.gmra.mxu0 %v369
        %v388 = vpop.f32.mrf.mxu0
        %v389 = vadd.f32 %v366, %v388
        %390 = vdwg.mxu0
        %v391 = vxor.u32 %v389, 2147483648
        %v392 = vmul.f32 %v391, 1.442695
        %v393 = vpow.pop %v392
        %v394 = vadd.f32 %v393, 1.0
        %v395 = vrcp.pop %v394
        %v396 = vmul.f32 %v394, %v395
        %v397 = vsub.f32 1.0, %v396
        %v398 = vmul.f32 %v395, %v397
        %v399 = vadd.f32 %v395, %v398
        %vm400 = vweird.f32 %v394
        %vm401 = vweird.f32 %v395
        %vm402 = vmor %vm400, %vm401
        %v403 = vsel %vm402, %v395, %v399
        %v404 = vand.u32 2147483647, %v394
        %vm405 = vcmp.eq.f32.partialorder %v404, 8.507059e+37
        %v406 = vand.u32 %v394, 2147483648
        %v407 = vor.u32 1.1754944e-38, %v406
        %v408 = vsel %vm405, %v407, %v403
        %v409 = vmul.f32 1.0, %v408
        %v410 = vperm.slane %v409, 0
        %v411 = vlaneseq
        %v412 = vshrl.u32 %v411, 7
        %414 = vset.pattern.permute.xlu0 %v412
        %415 = vperm.xlu0 %414, %v410
        %v416 = vpop.permute.xlu0 %415
        %v417 = vlaneseq
        %v418 = vshrl.u32 %v417, 7
        %v419 = vadd.s32 %v418, 8
        %420 = vset.pattern.permute.xlu0 %v419
        %421 = vperm.xlu0 %420, %v410
        %v422 = vpop.permute.xlu0 %421
        %v423 = vlaneseq
        %v424 = vshrl.u32 %v423, 7
        %v425 = vadd.s32 %v424, 16
        %426 = vset.pattern.permute.xlu0 %v425
        %427 = vperm.xlu0 %426, %v410
        %v428 = vpop.permute.xlu0 %427
        %v429 = vlaneseq
        %v430 = vshrl.u32 %v429, 7
        %v431 = vadd.s32 %v430, 24
        %432 = vset.pattern.permute.xlu0 %v431
        %433 = vperm.xlu0 %432, %v410
        %v434 = vpop.permute.xlu0 %433
        %v435 = vmul.f32 %v245, %v416
        %v436 = vmul.f32 %v246, %v416
        %v437 = vmul.f32 %v247, %v422
        %v438 = vmul.f32 %v248, %v422
        %v439 = vmul.f32 %v249, %v428
        %v440 = vmul.f32 %v250, %v428
        %v441 = vmul.f32 %v251, %v434
        %v442 = vmul.f32 %v252, %v434
        %443 = vst [vmem:[%s244] sm:$0xff] %v435
        %444 = vst [vmem:[%s244 + $0x8] sm:$0xff] %v436
        %445 = vst [vmem:[%s244 + $0x10] sm:$0xff] %v437
        %446 = vst [vmem:[%s244 + $0x18] sm:$0xff] %v438
        %447 = vst [vmem:[%s244 + $0x20] sm:$0xff] %v439
        %448 = vst [vmem:[%s244 + $0x28] sm:$0xff] %v440
        %449 = vst [vmem:[%s244 + $0x30] sm:$0xff] %v441
        %450 = vst [vmem:[%s244 + $0x38] sm:$0xff] %v442
        %s451 = sand.u32 %s140, 1
        %s452 = scalar_lea.sflag [#allocation4], %s451
        %s453 = sand.u32 %s140, 1
        %s454 = smul.addr %s453, 64
        %s455 = scalar_lea.vmem [#allocation5], %s454
        // Predicated region
        $region45: #{tpu_custom_call.1} parent=39 // pred_check
          %p456 = pneg %p150
        $region46: #{tpu_custom_call.1} parent=39 // pred_check_branch
          %458 = sbr.rel (%p456) target = $region48
        $region47: #{tpu_custom_call.1} parent=39 // pred_region
          %460 = vsyncadd %s452, 0
          %s461 = smul.addr %s22, 8
          %s462 = smul.addr %s461, 8
          %s463 = scalar_lea.hbm %s5, %s462
          %s464 = sshll.u32 %s455, 4
          %s465 = int_to_ptr.vmem [resolvable:$true] %s464
          %s466 = sshll.u32 %s463, 4
          %s467 = int_to_ptr.hbm [resolvable:$true] %s466
          %472 = dma.vmem_to_hbm [thread:$0]  %s465, 1024, %s467, %s452, 256, 256, 16
        $region48: #{tpu_custom_call.1} parent=39 // pred_fallthru
          _
      $region40: #{tpu_custom_call.1} parent=5 // pred_fallthru
        _
      %p473 = scmp.le.s32.totalorder 2, %s17
      // Predicated region
      $region49: #{tpu_custom_call.1} parent=5 // pred_check
        %p474 = pneg %p473
      $region50: #{tpu_custom_call.1} parent=5 // pred_check_branch
        %476 = sbr.rel (%p474) target = $region52
      $region51: #{tpu_custom_call.1} parent=5 // pred_region
        %s477 = ssub.s32 %s17, 2
        // Predicated region
        $region53: #{tpu_custom_call.1} parent=51 // pred_check
          %p478 = pneg %p156
        $region54: #{tpu_custom_call.1} parent=51 // pred_check_branch
          %480 = sbr.rel (%p478) target = $region56
        $region55: #{tpu_custom_call.1} parent=51 // pred_region
          %s481 = sand.u32 %s141, 1
          %s482 = scalar_lea.sflag [#allocation4], %s481
          %s483 = sand.u32 %s141, 1
          %s484 = smul.addr %s483, 64
          %s485 = scalar_lea.vmem [#allocation5], %s484
          %487 = dma.done %s482, 1024
        $region56: #{tpu_custom_call.1} parent=51 // pred_fallthru
          _
      $region52: #{tpu_custom_call.1} parent=5 // pred_fallthru
        _
    $region6: #{tpu_custom_call.1} parent=1 // loop_footer
      %s21 = sadd.s32 1, %s17
    $region7: #{tpu_custom_call.1} parent=1 // loop_footer_branch
      %16 = sbr.rel target = $region3
    $region8: #{tpu_custom_call.1} parent=1 // loop_exit
      _
    %488 = vsyncpa [#allocation3], 1
    %s489 = scalar_lea.sflag [#allocation3], 1
    %490 = vsyncpa %s489, 1
    %491 = vsyncpa [#allocation4], 1
    %s492 = scalar_lea.sflag [#allocation4], 1
    %493 = vsyncpa %s492, 1

</llo_original>
